<compile_context>
chip_gen: v6e
topology: v6e:2x2x1
jax: 0.10.0
libtpu: 0.0.40
codegen_flags: <defaults>
</compile_context>

<pallas_src>
import functools

import jax
import jax.numpy as jnp
from jax import lax
from jax.experimental import pallas as pl
from jax.experimental.pallas import tpu as pltpu


def lstm_stock_kernel(x2d_ref, w_ih_ref, bias_ref, w_hh_ref, w_head_ref,
                      b_fc_ref, out_ref, *, seq_len, hidden_size):
    """Fused LSTM forward: input projection + serial recurrence + fc head.

    x2d_ref    : (T*Bp, Ip)  f32  time-major input, batch/feature zero-padded
    w_ih_ref   : (Ip, 4H)    f32  W_ih^T, gate column order [i | f | o | g]
    bias_ref   : (1, 4H)     f32  b_ih + b_hh, same gate order
    w_hh_ref   : (H, 4H)     bf16 W_hh^T, same gate order
    w_head_ref : (T*H, T*O)  f32  kron(I_T, W_fc^T)  (block-diagonal fc head)
    b_fc_ref   : (1, T*O)    f32  fc bias tiled over time
    out_ref    : (Bp, T*O)   f32  y[b, t*O + o]
    """
    H = hidden_size
    T = seq_len
    Bp = x2d_ref.shape[0] // T

    # ---- pre-loop: input projection for ALL timesteps (one MXU matmul) ----
    x_proj = jnp.dot(x2d_ref[...], w_ih_ref[...],
                     preferred_element_type=jnp.float32) + bias_ref[...]

    # Recurrent weight loaded once; register/VMEM resident across all steps.
    # TODO(synk): hold W_hh in MXU staging registers across the unrolled loop
    # (pltpu.matmul_push_rhs / matmul_acc_lhs / matmul_pop) to shave the
    # per-step RHS push latency off the serial chain.
    w_hh = w_hh_ref[...]                                    # (H, 4H) bf16

    h = jnp.zeros((Bp, H), jnp.float32)
    c = jnp.zeros((Bp, H), jnp.float32)
    hs = []

    # T is small and static: fully unrolled Python loop; only the
    # h @ W_hh^T -> gates -> (c, h) chain is serial, everything else overlaps.
    for t in range(T):
        gates = x_proj[t * Bp:(t + 1) * Bp, :] + jnp.dot(
            h.astype(jnp.bfloat16), w_hh, preferred_element_type=jnp.float32)

        # TODO(synk): a lane-slice-free variant (full-width sigmoid/tanh +
        # pltpu.roll alignment of the gate blocks) would shave a few VPU
        # bundles per step on the serial chain.
        sig = jax.nn.sigmoid(gates[:, :3 * H])              # i, f, o in one pass
        g_g = jnp.tanh(gates[:, 3 * H:])
        i_g = sig[:, 0 * H:1 * H]
        f_g = sig[:, 1 * H:2 * H]
        o_g = sig[:, 2 * H:3 * H]

        c = f_g * c + i_g * g_g
        h = o_g * jnp.tanh(c)
        hs.append(h)

    # ---- post-loop: fc head, one MXU matmul, one lane-dense store ----
    hs_slab = jnp.concatenate(hs, axis=1)                   # (Bp, T*H)
    y = jnp.dot(hs_slab, w_head_ref[...],
                preferred_element_type=jnp.float32) + b_fc_ref[...]
    out_ref[...] = y.astype(out_ref.dtype)                  # single (Bp, T*O) store


def prepare_params(params, seq_len):
    """One-time weight layout prep (permute gates, transpose, pad, kron)."""
    w_ih, w_hh, b_ih, b_hh, w_fc, b_fc = (
        params["w_ih"], params["w_hh"], params["b_ih"],
        params["b_hh"], params["w_fc"], params["b_fc"])
    H = w_hh.shape[1]
    I = w_ih.shape[1]
    T = seq_len

    # Permute torch gate blocks [i, f, g, o] -> kernel order [i, f, o, g].
    perm = jnp.concatenate([
        jnp.arange(0 * H, 1 * H),   # i
        jnp.arange(1 * H, 2 * H),   # f
        jnp.arange(3 * H, 4 * H),   # o
        jnp.arange(2 * H, 3 * H),   # g
    ])
    w_ih_p = w_ih[perm].astype(jnp.float32)                  # (4H, I)
    w_hh_p = w_hh[perm].astype(jnp.float32)                  # (4H, H)
    bias_p = (b_ih + b_hh)[perm].astype(jnp.float32)         # (4H,)

    i_pad = max(8, ((I + 7) // 8) * 8)
    w_ih_t = jnp.pad(jnp.transpose(w_ih_p), ((0, i_pad - I), (0, 0)))  # (Ip,4H)
    w_hh_t = jnp.transpose(w_hh_p).astype(jnp.bfloat16)                # (H,4H)

    # Block-diagonal fc head: y[:, t*O + o] = h_t . w_fc[o].
    w_head = jnp.kron(jnp.eye(T, dtype=jnp.float32),
                      jnp.transpose(w_fc.astype(jnp.float32)))          # (T*H,T*O)
    b_fc_row = jnp.tile(b_fc.astype(jnp.float32), T)[None, :]           # (1,T*O)

    return {"w_ih_t": w_ih_t, "bias": bias_p[None, :], "w_hh_t": w_hh_t,
            "w_head": w_head, "b_fc_row": b_fc_row}


@jax.jit
def lstm_stock_forward(x, prepped):
    """x: (B, T, I) float32.  Returns (B, T, O) float32 (PyTorch semantics)."""
    B, T, I = x.shape
    w_ih_t = prepped["w_ih_t"]
    w_hh_t = prepped["w_hh_t"]
    w_head = prepped["w_head"]
    H = w_hh_t.shape[0]
    I_pad = w_ih_t.shape[0]
    TO = w_head.shape[1]
    assert w_head.shape[0] == T * H, "prepare_params(seq_len) must match x"
    O = TO // T

    B_pad = max(8, ((B + 7) // 8) * 8)

    # Layout plumbing (one tiny fusion under jit): time-major, zero-pad batch
    # to the 8-sublane width and features to the padded W_ih^T rows.
    x_tm = jnp.transpose(x.astype(jnp.float32), (1, 0, 2))          # (T, B, I)
    x_tm = jnp.pad(x_tm, ((0, 0), (0, B_pad - B), (0, I_pad - I)))
    x2d = x_tm.reshape(T * B_pad, I_pad)                            # (T*Bp, Ip)

    vmem = pl.BlockSpec(memory_space=pltpu.MemorySpace.VMEM)

    flops = (2 * T * B_pad * I_pad * 4 * H        # input projection
             + 2 * T * B_pad * H * 4 * H          # recurrence
             + 2 * B_pad * T * H * TO             # fc head
             + 10 * T * B_pad * H)                # gate elementwise
    transcendentals = 5 * T * B_pad * H           # sigmoid(3H)+tanh(H)+tanh(c)
    bytes_accessed = 4 * (x2d.size + w_ih_t.size + prepped["bias"].size
                          + w_head.size + prepped["b_fc_row"].size
                          + B_pad * TO) + 2 * w_hh_t.size

    y = pl.pallas_call(
        functools.partial(lstm_stock_kernel, seq_len=T, hidden_size=H),
        out_shape=jax.ShapeDtypeStruct((B_pad, TO), jnp.float32),
        in_specs=[vmem] * 6,
        out_specs=vmem,
        cost_estimate=pl.CostEstimate(flops=flops,
                                      transcendentals=transcendentals,
                                      bytes_accessed=bytes_accessed),
    )(x2d, w_ih_t, prepped["bias"], w_hh_t, w_head, prepped["b_fc_row"])

    # TODO(synk): for large B, add a batch grid axis marked
    # dimension_semantics=("parallel",) (2 TCs on v7x), size per-core tiles
    # against 64 MiB VMEM on v7x, and keep >=128 batch rows per MXU call
    # (v6e/v7x) before splitting.
    return y[:B].reshape(B, T, O)


def init_params(key, input_size=3, hidden_size=32, output_size=1):
    """Deterministic init matching torch shapes (uniform +-1/sqrt(H))."""
    ks = jax.random.split(key, 6)
    k_lstm = 1.0 / jnp.sqrt(jnp.float32(hidden_size))
    k_fc = 1.0 / jnp.sqrt(jnp.float32(hidden_size))
    u = lambda k, shape, a: jax.random.uniform(k, shape, jnp.float32, -a, a)
    return {
        "w_ih": u(ks[0], (4 * hidden_size, input_size), k_lstm),
        "w_hh": u(ks[1], (4 * hidden_size, hidden_size), k_lstm),
        "b_ih": u(ks[2], (4 * hidden_size,), k_lstm),
        "b_hh": u(ks[3], (4 * hidden_size,), k_lstm),
        "w_fc": u(ks[4], (output_size, hidden_size), k_fc),
        "b_fc": u(ks[5], (output_size,), k_fc),
    }


def lstm_stock_reference(x, params):
    """Pure-JAX f32 reference of the torch forward, for sanity checking."""
    w_ih, w_hh = params["w_ih"], params["w_hh"]
    b = params["b_ih"] + params["b_hh"]
    w_fc, b_fc = params["w_fc"], params["b_fc"]
    H = w_hh.shape[1]
    B, T, I = x.shape

    def step(carry, x_t):
        h, c = carry
        gates = x_t @ w_ih.T + h @ w_hh.T + b
        i_g = jax.nn.sigmoid(gates[:, 0 * H:1 * H])
        f_g = jax.nn.sigmoid(gates[:, 1 * H:2 * H])
        g_g = jnp.tanh(gates[:, 2 * H:3 * H])
        o_g = jax.nn.sigmoid(gates[:, 3 * H:4 * H])
        c_new = f_g * c + i_g * g_g
        h_new = o_g * jnp.tanh(c_new)
        return (h_new, c_new), h_new

    h0 = jnp.zeros((B, H), jnp.float32)
    c0 = jnp.zeros((B, H), jnp.float32)
    _, hs = lax.scan(step, (h0, c0), jnp.transpose(x, (1, 0, 2)))  # (T, B, H)
    y = jnp.einsum("tbh,oh->tbo", hs, w_fc) + b_fc
    return jnp.transpose(y, (1, 0, 2))


if __name__ == "__main__":
    key = jax.random.PRNGKey(0)
    k_x, k_p = jax.random.split(key)

    B, T, I, H, O = 2, 8, 3, 32, 1
    x = jax.random.normal(k_x, (B, T, I), dtype=jnp.float32)
    params = init_params(k_p, input_size=I, hidden_size=H, output_size=O)
    prepped = prepare_params(params, seq_len=T)

    out = jax.block_until_ready(lstm_stock_forward(x, prepped))
    assert out.shape == (B, T, O), out.shape

    ref = jax.block_until_ready(lstm_stock_reference(x, params))
    assert jnp.allclose(out, ref, rtol=2e-3, atol=2e-3), (
        "mismatch vs reference: max abs err "
        f"{float(jnp.max(jnp.abs(out - ref)))}")

    print("KERNEL_OK")
</pallas_src>

<mosaic_0001>
module attributes {stable_mosaic.version = 11 : i64} {
  func.func @lstm_stock_kernel(%arg0: memref<64x8xf32, #tpu.memory_space<vmem>>, %arg1: memref<8x128xf32, #tpu.memory_space<vmem>>, %arg2: memref<1x128xf32, #tpu.memory_space<vmem>>, %arg3: memref<32x128xbf16, #tpu.memory_space<vmem>>, %arg4: memref<256x8xf32, #tpu.memory_space<vmem>>, %arg5: memref<1x8xf32, #tpu.memory_space<vmem>>, %arg6: memref<8x8xf32, #tpu.memory_space<vmem>>) attributes {dimension_semantics = [], scalar_prefetch = 0 : i64, scratch_operands = 0 : i64, tpu.core_type = #tpu.core_type<tc>} {
    %c0 = arith.constant 0 : index
    %c0_0 = arith.constant 0 : index
    %0 = vector.load %arg0[%c0, %c0_0] : memref<64x8xf32, #tpu.memory_space<vmem>>, vector<64x8xf32>
    %c0_1 = arith.constant 0 : index
    %c0_2 = arith.constant 0 : index
    %1 = vector.load %arg1[%c0_1, %c0_2] : memref<8x128xf32, #tpu.memory_space<vmem>>, vector<8x128xf32>
    %cst = arith.constant dense<0.000000e+00> : vector<64x128xf32>
    %2 = tpu.matmul %0, %1, %cst {dimension_numbers = #tpu.dot_dimension_numbers<[1], [0], [0], [1], [0, 0, 1, 1], [], []>} : vector<64x8xf32>, vector<8x128xf32>, vector<64x128xf32> -> vector<64x128xf32>
    %c0_3 = arith.constant 0 : index
    %c0_4 = arith.constant 0 : index
    %3 = vector.load %arg2[%c0_3, %c0_4] : memref<1x128xf32, #tpu.memory_space<vmem>>, vector<1x128xf32>
    %4 = vector.broadcast %3 : vector<1x128xf32> to vector<64x128xf32>
    %5 = arith.addf %2, %4 : vector<64x128xf32>
    %c0_5 = arith.constant 0 : index
    %c0_6 = arith.constant 0 : index
    %6 = vector.load %arg3[%c0_5, %c0_6] : memref<32x128xbf16, #tpu.memory_space<vmem>>, vector<32x128xbf16>
    %cst_7 = arith.constant 0.000000e+00 : f32
    %7 = vector.broadcast %cst_7 : f32 to vector<8x32xf32>
    %cst_8 = arith.constant 0.000000e+00 : f32
    %8 = vector.broadcast %cst_8 : f32 to vector<8x32xf32>
    %9 = vector.extract_strided_slice %5 {offsets = [0, 0], sizes = [8, 128], strides = [1, 1]} : vector<64x128xf32> to vector<8x128xf32>
    %10 = arith.truncf %7 : vector<8x32xf32> to vector<8x32xbf16>
    %cst_9 = arith.constant dense<0.000000e+00> : vector<8x128xf32>
    %11 = tpu.matmul %10, %6, %cst_9 {dimension_numbers = #tpu.dot_dimension_numbers<[1], [0], [0], [1], [0, 0, 1, 1], [], []>} : vector<8x32xbf16>, vector<32x128xbf16>, vector<8x128xf32> -> vector<8x128xf32>
    %12 = arith.addf %9, %11 : vector<8x128xf32>
    %13 = vector.extract_strided_slice %12 {offsets = [0, 0], sizes = [8, 96], strides = [1, 1]} : vector<8x128xf32> to vector<8x96xf32>
    %14 = arith.negf %13 : vector<8x96xf32>
    %15 = math.exp %14 : vector<8x96xf32>
    %cst_10 = arith.constant 1.000000e+00 : f32
    %16 = vector.broadcast %cst_10 : f32 to vector<8x96xf32>
    %17 = arith.addf %16, %15 : vector<8x96xf32>
    %18 = arith.divf %16, %17 : vector<8x96xf32>
    %19 = vector.extract_strided_slice %12 {offsets = [0, 96], sizes = [8, 32], strides = [1, 1]} : vector<8x128xf32> to vector<8x32xf32>
    %20 = math.tanh %19 : vector<8x32xf32>
    %21 = vector.extract_strided_slice %18 {offsets = [0, 0], sizes = [8, 32], strides = [1, 1]} : vector<8x96xf32> to vector<8x32xf32>
    %22 = vector.extract_strided_slice %18 {offsets = [0, 32], sizes = [8, 32], strides = [1, 1]} : vector<8x96xf32> to vector<8x32xf32>
    %23 = vector.extract_strided_slice %18 {offsets = [0, 64], sizes = [8, 32], strides = [1, 1]} : vector<8x96xf32> to vector<8x32xf32>
    %24 = arith.mulf %22, %8 : vector<8x32xf32>
    %25 = arith.mulf %21, %20 : vector<8x32xf32>
    %26 = arith.addf %24, %25 : vector<8x32xf32>
    %27 = math.tanh %26 : vector<8x32xf32>
    %28 = arith.mulf %23, %27 : vector<8x32xf32>
    %29 = vector.extract_strided_slice %5 {offsets = [8, 0], sizes = [8, 128], strides = [1, 1]} : vector<64x128xf32> to vector<8x128xf32>
    %30 = arith.truncf %28 : vector<8x32xf32> to vector<8x32xbf16>
    %cst_11 = arith.constant dense<0.000000e+00> : vector<8x128xf32>
    %31 = tpu.matmul %30, %6, %cst_11 {dimension_numbers = #tpu.dot_dimension_numbers<[1], [0], [0], [1], [0, 0, 1, 1], [], []>} : vector<8x32xbf16>, vector<32x128xbf16>, vector<8x128xf32> -> vector<8x128xf32>
    %32 = arith.addf %29, %31 : vector<8x128xf32>
    %33 = vector.extract_strided_slice %32 {offsets = [0, 0], sizes = [8, 96], strides = [1, 1]} : vector<8x128xf32> to vector<8x96xf32>
    %34 = arith.negf %33 : vector<8x96xf32>
    %35 = math.exp %34 : vector<8x96xf32>
    %cst_12 = arith.constant 1.000000e+00 : f32
    %36 = vector.broadcast %cst_12 : f32 to vector<8x96xf32>
    %37 = arith.addf %36, %35 : vector<8x96xf32>
    %38 = arith.divf %36, %37 : vector<8x96xf32>
    %39 = vector.extract_strided_slice %32 {offsets = [0, 96], sizes = [8, 32], strides = [1, 1]} : vector<8x128xf32> to vector<8x32xf32>
    %40 = math.tanh %39 : vector<8x32xf32>
    %41 = vector.extract_strided_slice %38 {offsets = [0, 0], sizes = [8, 32], strides = [1, 1]} : vector<8x96xf32> to vector<8x32xf32>
    %42 = vector.extract_strided_slice %38 {offsets = [0, 32], sizes = [8, 32], strides = [1, 1]} : vector<8x96xf32> to vector<8x32xf32>
    %43 = vector.extract_strided_slice %38 {offsets = [0, 64], sizes = [8, 32], strides = [1, 1]} : vector<8x96xf32> to vector<8x32xf32>
    %44 = arith.mulf %42, %26 : vector<8x32xf32>
    %45 = arith.mulf %41, %40 : vector<8x32xf32>
    %46 = arith.addf %44, %45 : vector<8x32xf32>
    %47 = math.tanh %46 : vector<8x32xf32>
    %48 = arith.mulf %43, %47 : vector<8x32xf32>
    %49 = vector.extract_strided_slice %5 {offsets = [16, 0], sizes = [8, 128], strides = [1, 1]} : vector<64x128xf32> to vector<8x128xf32>
    %50 = arith.truncf %48 : vector<8x32xf32> to vector<8x32xbf16>
    %cst_13 = arith.constant dense<0.000000e+00> : vector<8x128xf32>
    %51 = tpu.matmul %50, %6, %cst_13 {dimension_numbers = #tpu.dot_dimension_numbers<[1], [0], [0], [1], [0, 0, 1, 1], [], []>} : vector<8x32xbf16>, vector<32x128xbf16>, vector<8x128xf32> -> vector<8x128xf32>
    %52 = arith.addf %49, %51 : vector<8x128xf32>
    %53 = vector.extract_strided_slice %52 {offsets = [0, 0], sizes = [8, 96], strides = [1, 1]} : vector<8x128xf32> to vector<8x96xf32>
    %54 = arith.negf %53 : vector<8x96xf32>
    %55 = math.exp %54 : vector<8x96xf32>
    %cst_14 = arith.constant 1.000000e+00 : f32
    %56 = vector.broadcast %cst_14 : f32 to vector<8x96xf32>
    %57 = arith.addf %56, %55 : vector<8x96xf32>
    %58 = arith.divf %56, %57 : vector<8x96xf32>
    %59 = vector.extract_strided_slice %52 {offsets = [0, 96], sizes = [8, 32], strides = [1, 1]} : vector<8x128xf32> to vector<8x32xf32>
    %60 = math.tanh %59 : vector<8x32xf32>
    %61 = vector.extract_strided_slice %58 {offsets = [0, 0], sizes = [8, 32], strides = [1, 1]} : vector<8x96xf32> to vector<8x32xf32>
    %62 = vector.extract_strided_slice %58 {offsets = [0, 32], sizes = [8, 32], strides = [1, 1]} : vector<8x96xf32> to vector<8x32xf32>
    %63 = vector.extract_strided_slice %58 {offsets = [0, 64], sizes = [8, 32], strides = [1, 1]} : vector<8x96xf32> to vector<8x32xf32>
    %64 = arith.mulf %62, %46 : vector<8x32xf32>
    %65 = arith.mulf %61, %60 : vector<8x32xf32>
    %66 = arith.addf %64, %65 : vector<8x32xf32>
    %67 = math.tanh %66 : vector<8x32xf32>
    %68 = arith.mulf %63, %67 : vector<8x32xf32>
    %69 = vector.extract_strided_slice %5 {offsets = [24, 0], sizes = [8, 128], strides = [1, 1]} : vector<64x128xf32> to vector<8x128xf32>
    %70 = arith.truncf %68 : vector<8x32xf32> to vector<8x32xbf16>
    %cst_15 = arith.constant dense<0.000000e+00> : vector<8x128xf32>
    %71 = tpu.matmul %70, %6, %cst_15 {dimension_numbers = #tpu.dot_dimension_numbers<[1], [0], [0], [1], [0, 0, 1, 1], [], []>} : vector<8x32xbf16>, vector<32x128xbf16>, vector<8x128xf32> -> vector<8x128xf32>
    %72 = arith.addf %69, %71 : vector<8x128xf32>
    %73 = vector.extract_strided_slice %72 {offsets = [0, 0], sizes = [8, 96], strides = [1, 1]} : vector<8x128xf32> to vector<8x96xf32>
    %74 = arith.negf %73 : vector<8x96xf32>
    %75 = math.exp %74 : vector<8x96xf32>
    %cst_16 = arith.constant 1.000000e+00 : f32
    %76 = vector.broadcast %cst_16 : f32 to vector<8x96xf32>
    %77 = arith.addf %76, %75 : vector<8x96xf32>
    %78 = arith.divf %76, %77 : vector<8x96xf32>
    %79 = vector.extract_strided_slice %72 {offsets = [0, 96], sizes = [8, 32], strides = [1, 1]} : vector<8x128xf32> to vector<8x32xf32>
    %80 = math.tanh %79 : vector<8x32xf32>
    %81 = vector.extract_strided_slice %78 {offsets = [0, 0], sizes = [8, 32], strides = [1, 1]} : vector<8x96xf32> to vector<8x32xf32>
    %82 = vector.extract_strided_slice %78 {offsets = [0, 32], sizes = [8, 32], strides = [1, 1]} : vector<8x96xf32> to vector<8x32xf32>
    %83 = vector.extract_strided_slice %78 {offsets = [0, 64], sizes = [8, 32], strides = [1, 1]} : vector<8x96xf32> to vector<8x32xf32>
    %84 = arith.mulf %82, %66 : vector<8x32xf32>
    %85 = arith.mulf %81, %80 : vector<8x32xf32>
    %86 = arith.addf %84, %85 : vector<8x32xf32>
    %87 = math.tanh %86 : vector<8x32xf32>
    %88 = arith.mulf %83, %87 : vector<8x32xf32>
    %89 = vector.extract_strided_slice %5 {offsets = [32, 0], sizes = [8, 128], strides = [1, 1]} : vector<64x128xf32> to vector<8x128xf32>
    %90 = arith.truncf %88 : vector<8x32xf32> to vector<8x32xbf16>
    %cst_17 = arith.constant dense<0.000000e+00> : vector<8x128xf32>
    %91 = tpu.matmul %90, %6, %cst_17 {dimension_numbers = #tpu.dot_dimension_numbers<[1], [0], [0], [1], [0, 0, 1, 1], [], []>} : vector<8x32xbf16>, vector<32x128xbf16>, vector<8x128xf32> -> vector<8x128xf32>
    %92 = arith.addf %89, %91 : vector<8x128xf32>
    %93 = vector.extract_strided_slice %92 {offsets = [0, 0], sizes = [8, 96], strides = [1, 1]} : vector<8x128xf32> to vector<8x96xf32>
    %94 = arith.negf %93 : vector<8x96xf32>
    %95 = math.exp %94 : vector<8x96xf32>
    %cst_18 = arith.constant 1.000000e+00 : f32
    %96 = vector.broadcast %cst_18 : f32 to vector<8x96xf32>
    %97 = arith.addf %96, %95 : vector<8x96xf32>
    %98 = arith.divf %96, %97 : vector<8x96xf32>
    %99 = vector.extract_strided_slice %92 {offsets = [0, 96], sizes = [8, 32], strides = [1, 1]} : vector<8x128xf32> to vector<8x32xf32>
    %100 = math.tanh %99 : vector<8x32xf32>
    %101 = vector.extract_strided_slice %98 {offsets = [0, 0], sizes = [8, 32], strides = [1, 1]} : vector<8x96xf32> to vector<8x32xf32>
    %102 = vector.extract_strided_slice %98 {offsets = [0, 32], sizes = [8, 32], strides = [1, 1]} : vector<8x96xf32> to vector<8x32xf32>
    %103 = vector.extract_strided_slice %98 {offsets = [0, 64], sizes = [8, 32], strides = [1, 1]} : vector<8x96xf32> to vector<8x32xf32>
    %104 = arith.mulf %102, %86 : vector<8x32xf32>
    %105 = arith.mulf %101, %100 : vector<8x32xf32>
    %106 = arith.addf %104, %105 : vector<8x32xf32>
    %107 = math.tanh %106 : vector<8x32xf32>
    %108 = arith.mulf %103, %107 : vector<8x32xf32>
    %109 = vector.extract_strided_slice %5 {offsets = [40, 0], sizes = [8, 128], strides = [1, 1]} : vector<64x128xf32> to vector<8x128xf32>
    %110 = arith.truncf %108 : vector<8x32xf32> to vector<8x32xbf16>
    %cst_19 = arith.constant dense<0.000000e+00> : vector<8x128xf32>
    %111 = tpu.matmul %110, %6, %cst_19 {dimension_numbers = #tpu.dot_dimension_numbers<[1], [0], [0], [1], [0, 0, 1, 1], [], []>} : vector<8x32xbf16>, vector<32x128xbf16>, vector<8x128xf32> -> vector<8x128xf32>
    %112 = arith.addf %109, %111 : vector<8x128xf32>
    %113 = vector.extract_strided_slice %112 {offsets = [0, 0], sizes = [8, 96], strides = [1, 1]} : vector<8x128xf32> to vector<8x96xf32>
    %114 = arith.negf %113 : vector<8x96xf32>
    %115 = math.exp %114 : vector<8x96xf32>
    %cst_20 = arith.constant 1.000000e+00 : f32
    %116 = vector.broadcast %cst_20 : f32 to vector<8x96xf32>
    %117 = arith.addf %116, %115 : vector<8x96xf32>
    %118 = arith.divf %116, %117 : vector<8x96xf32>
    %119 = vector.extract_strided_slice %112 {offsets = [0, 96], sizes = [8, 32], strides = [1, 1]} : vector<8x128xf32> to vector<8x32xf32>
    %120 = math.tanh %119 : vector<8x32xf32>
    %121 = vector.extract_strided_slice %118 {offsets = [0, 0], sizes = [8, 32], strides = [1, 1]} : vector<8x96xf32> to vector<8x32xf32>
    %122 = vector.extract_strided_slice %118 {offsets = [0, 32], sizes = [8, 32], strides = [1, 1]} : vector<8x96xf32> to vector<8x32xf32>
    %123 = vector.extract_strided_slice %118 {offsets = [0, 64], sizes = [8, 32], strides = [1, 1]} : vector<8x96xf32> to vector<8x32xf32>
    %124 = arith.mulf %122, %106 : vector<8x32xf32>
    %125 = arith.mulf %121, %120 : vector<8x32xf32>
    %126 = arith.addf %124, %125 : vector<8x32xf32>
    %127 = math.tanh %126 : vector<8x32xf32>
    %128 = arith.mulf %123, %127 : vector<8x32xf32>
    %129 = vector.extract_strided_slice %5 {offsets = [48, 0], sizes = [8, 128], strides = [1, 1]} : vector<64x128xf32> to vector<8x128xf32>
    %130 = arith.truncf %128 : vector<8x32xf32> to vector<8x32xbf16>
    %cst_21 = arith.constant dense<0.000000e+00> : vector<8x128xf32>
    %131 = tpu.matmul %130, %6, %cst_21 {dimension_numbers = #tpu.dot_dimension_numbers<[1], [0], [0], [1], [0, 0, 1, 1], [], []>} : vector<8x32xbf16>, vector<32x128xbf16>, vector<8x128xf32> -> vector<8x128xf32>
    %132 = arith.addf %129, %131 : vector<8x128xf32>
    %133 = vector.extract_strided_slice %132 {offsets = [0, 0], sizes = [8, 96], strides = [1, 1]} : vector<8x128xf32> to vector<8x96xf32>
    %134 = arith.negf %133 : vector<8x96xf32>
    %135 = math.exp %134 : vector<8x96xf32>
    %cst_22 = arith.constant 1.000000e+00 : f32
    %136 = vector.broadcast %cst_22 : f32 to vector<8x96xf32>
    %137 = arith.addf %136, %135 : vector<8x96xf32>
    %138 = arith.divf %136, %137 : vector<8x96xf32>
    %139 = vector.extract_strided_slice %132 {offsets = [0, 96], sizes = [8, 32], strides = [1, 1]} : vector<8x128xf32> to vector<8x32xf32>
    %140 = math.tanh %139 : vector<8x32xf32>
    %141 = vector.extract_strided_slice %138 {offsets = [0, 0], sizes = [8, 32], strides = [1, 1]} : vector<8x96xf32> to vector<8x32xf32>
    %142 = vector.extract_strided_slice %138 {offsets = [0, 32], sizes = [8, 32], strides = [1, 1]} : vector<8x96xf32> to vector<8x32xf32>
    %143 = vector.extract_strided_slice %138 {offsets = [0, 64], sizes = [8, 32], strides = [1, 1]} : vector<8x96xf32> to vector<8x32xf32>
    %144 = arith.mulf %142, %126 : vector<8x32xf32>
    %145 = arith.mulf %141, %140 : vector<8x32xf32>
    %146 = arith.addf %144, %145 : vector<8x32xf32>
    %147 = math.tanh %146 : vector<8x32xf32>
    %148 = arith.mulf %143, %147 : vector<8x32xf32>
    %149 = vector.extract_strided_slice %5 {offsets = [56, 0], sizes = [8, 128], strides = [1, 1]} : vector<64x128xf32> to vector<8x128xf32>
    %150 = arith.truncf %148 : vector<8x32xf32> to vector<8x32xbf16>
    %cst_23 = arith.constant dense<0.000000e+00> : vector<8x128xf32>
    %151 = tpu.matmul %150, %6, %cst_23 {dimension_numbers = #tpu.dot_dimension_numbers<[1], [0], [0], [1], [0, 0, 1, 1], [], []>} : vector<8x32xbf16>, vector<32x128xbf16>, vector<8x128xf32> -> vector<8x128xf32>
    %152 = arith.addf %149, %151 : vector<8x128xf32>
    %153 = vector.extract_strided_slice %152 {offsets = [0, 0], sizes = [8, 96], strides = [1, 1]} : vector<8x128xf32> to vector<8x96xf32>
    %154 = arith.negf %153 : vector<8x96xf32>
    %155 = math.exp %154 : vector<8x96xf32>
    %cst_24 = arith.constant 1.000000e+00 : f32
    %156 = vector.broadcast %cst_24 : f32 to vector<8x96xf32>
    %157 = arith.addf %156, %155 : vector<8x96xf32>
    %158 = arith.divf %156, %157 : vector<8x96xf32>
    %159 = vector.extract_strided_slice %152 {offsets = [0, 96], sizes = [8, 32], strides = [1, 1]} : vector<8x128xf32> to vector<8x32xf32>
    %160 = math.tanh %159 : vector<8x32xf32>
    %161 = vector.extract_strided_slice %158 {offsets = [0, 0], sizes = [8, 32], strides = [1, 1]} : vector<8x96xf32> to vector<8x32xf32>
    %162 = vector.extract_strided_slice %158 {offsets = [0, 32], sizes = [8, 32], strides = [1, 1]} : vector<8x96xf32> to vector<8x32xf32>
    %163 = vector.extract_strided_slice %158 {offsets = [0, 64], sizes = [8, 32], strides = [1, 1]} : vector<8x96xf32> to vector<8x32xf32>
    %164 = arith.mulf %162, %146 : vector<8x32xf32>
    %165 = arith.mulf %161, %160 : vector<8x32xf32>
    %166 = arith.addf %164, %165 : vector<8x32xf32>
    %167 = math.tanh %166 : vector<8x32xf32>
    %168 = arith.mulf %163, %167 : vector<8x32xf32>
    %169 = tpu.concatenate %28, %48, %68, %88, %108, %128, %148, %168 in 1 : vector<8x32xf32>, vector<8x32xf32>, vector<8x32xf32>, vector<8x32xf32>, vector<8x32xf32>, vector<8x32xf32>, vector<8x32xf32>, vector<8x32xf32> -> vector<8x256xf32>
    %c0_25 = arith.constant 0 : index
    %c0_26 = arith.constant 0 : index
    %170 = vector.load %arg4[%c0_25, %c0_26] : memref<256x8xf32, #tpu.memory_space<vmem>>, vector<256x8xf32>
    %cst_27 = arith.constant dense<0.000000e+00> : vector<8x8xf32>
    %171 = tpu.matmul %169, %170, %cst_27 {dimension_numbers = #tpu.dot_dimension_numbers<[1], [0], [0], [1], [0, 0, 1, 1], [], []>} : vector<8x256xf32>, vector<256x8xf32>, vector<8x8xf32> -> vector<8x8xf32>
    %c0_28 = arith.constant 0 : index
    %c0_29 = arith.constant 0 : index
    %172 = vector.load %arg5[%c0_28, %c0_29] : memref<1x8xf32, #tpu.memory_space<vmem>>, vector<1x8xf32>
    %173 = vector.broadcast %172 : vector<1x8xf32> to vector<8x8xf32>
    %174 = arith.addf %171, %173 : vector<8x8xf32>
    %c0_30 = arith.constant 0 : index
    %c0_31 = arith.constant 0 : index
    %175 = vector.load %arg6[%c0_30, %c0_31] : memref<8x8xf32, #tpu.memory_space<vmem>>, vector<8x8xf32>
    tpu.vector_store %arg6[%c0_30, %c0_31], %174 {strides = array<i32>} : memref<8x8xf32, #tpu.memory_space<vmem>>, vector<8x8xf32>,
    return
  }
}

</mosaic_0001>

<llo_original>
// kernel: lstm_stock_forward.1
$region0: #{lstm_stock_forward.1}
  #allocation0 [shape = 'u32[]', space=smem, size = 0x4, offset = 0x4, fixed_abs, tag = 'smem constant byte address 0x4 - core index']
  #allocation1 [shape = 'u32[144,128]{1,0:T(1,128)}', space=vmem, size = 0x12000, scoped, tag = 'internal scratch']
  %s0 = inlined_call_operand.vmem [shape: f32[64,8], index: 0, kind: input, shape index: {}]
  %s1 = inlined_call_operand.vmem [shape: f32[8,128], index: 1, kind: input, shape index: {}]
  %s2 = inlined_call_operand.vmem [shape: f32[1,128], index: 2, kind: input, shape index: {}]
  %s3 = inlined_call_operand.vmem [shape: bf16[32,128], index: 3, kind: input, shape index: {}]
  %s4 = inlined_call_operand.vmem [shape: f32[256,8], index: 4, kind: input, shape index: {}]
  %s5 = inlined_call_operand.vmem [shape: f32[1,8], index: 5, kind: input, shape index: {}]
  %s6 = inlined_call_operand.vmem [shape: f32[8,8], index: 6, kind: output, shape index: {}]
  %s7 = sld [smem:[#allocation0]]
  $region34: #{lstm_stock_forward.1} parent=0
    _
  %s9 = ssub.s32 1, %s7
  %s10 = scalar_select 0, %s9, %s7
  // Predicated region
  $region2: #{lstm_stock_forward.1} parent=0 // pred_check
    _
  $region3: #{lstm_stock_forward.1} parent=0 // pred_check_branch
    %12 = sbr.rel (0) target = $region5
  $region4: #{lstm_stock_forward.1} parent=0 // pred_region
    _
  $region5: #{lstm_stock_forward.1} parent=0 // pred_fallthru
    _
  // Predicated region
  $region6: #{lstm_stock_forward.1} parent=0 // pred_check
    _
  $region7: #{lstm_stock_forward.1} parent=0 // pred_check_branch
    %14 = sbr.rel (0) target = $region9
  $region8: #{lstm_stock_forward.1} parent=0 // pred_region
    _
  $region9: #{lstm_stock_forward.1} parent=0 // pred_fallthru
    _
  // Predicated region
  $region10: #{lstm_stock_forward.1} parent=0 // pred_check
    _
  $region11: #{lstm_stock_forward.1} parent=0 // pred_check_branch
    %16 = sbr.rel (0) target = $region13
  $region12: #{lstm_stock_forward.1} parent=0 // pred_region
    _
  $region13: #{lstm_stock_forward.1} parent=0 // pred_fallthru
    _
  // Predicated region
  $region14: #{lstm_stock_forward.1} parent=0 // pred_check
    _
  $region15: #{lstm_stock_forward.1} parent=0 // pred_check_branch
    %18 = sbr.rel (0) target = $region17
  $region16: #{lstm_stock_forward.1} parent=0 // pred_region
    _
  $region17: #{lstm_stock_forward.1} parent=0 // pred_fallthru
    _
  // Predicated region
  $region18: #{lstm_stock_forward.1} parent=0 // pred_check
    _
  $region19: #{lstm_stock_forward.1} parent=0 // pred_check_branch
    %20 = sbr.rel (0) target = $region21
  $region20: #{lstm_stock_forward.1} parent=0 // pred_region
    _
  $region21: #{lstm_stock_forward.1} parent=0 // pred_fallthru
    _
  // Predicated region
  $region22: #{lstm_stock_forward.1} parent=0 // pred_check
    _
  $region23: #{lstm_stock_forward.1} parent=0 // pred_check_branch
    %22 = sbr.rel (0) target = $region25
  $region24: #{lstm_stock_forward.1} parent=0 // pred_region
    _
  $region25: #{lstm_stock_forward.1} parent=0 // pred_fallthru
    _
  %v24 = vld [vmem:[%s0] sm:$0xff]
  %v25 = vld [vmem:[%s0 + $0x8] sm:$0xff]
  %v26 = vld [vmem:[%s0 + $0x10] sm:$0xff]
  %v27 = vld [vmem:[%s0 + $0x18] sm:$0xff]
  %v28 = vld [vmem:[%s0 + $0x20] sm:$0xff]
  %v29 = vld [vmem:[%s0 + $0x28] sm:$0xff]
  %v30 = vld [vmem:[%s0 + $0x30] sm:$0xff]
  %v31 = vld [vmem:[%s0 + $0x38] sm:$0xff]
  %v32 = vld [vmem:[%s1] sm:$0xff]
  %v33 = vld [vmem:[%s2] sm:$0x1]
  %v35 = vlaneseq
  %v36 = vshrl.u32 %v35, 7
  %v37 = vsub.s32 0, %v36
  %v38 = vrot.slane %v33, %v37
  %vm40 = vcmask 64512
  %v42 = vsel %vm40, %v24, 0
  %v45 = vsel %vm40, %v25, 0
  %v48 = vsel %vm40, %v26, 0
  %v51 = vsel %vm40, %v27, 0
  %v54 = vsel %vm40, %v28, 0
  %v57 = vsel %vm40, %v29, 0
  %v60 = vsel %vm40, %v30, 0
  %v63 = vsel %vm40, %v31, 0
  %65 = vmatprep.subr.mxu0 0.0
  %66 = vmatpush1.msra.mxu0 0.0
  %67 = vmatprep.subr.mxu0 0.0
  %68 = vmatpush1.msra.mxu0 0.0
  %69 = vmatprep.subr.mxu0 0.0
  %70 = vmatpush1.msra.mxu0 0.0
  %71 = vmatprep.subr.mxu0 0.0
  %72 = vmatpush1.msra.mxu0 0.0
  %73 = vmatprep.subr.mxu0 0.0
  %74 = vmatpush1.msra.mxu0 0.0
  %75 = vmatprep.subr.mxu0 0.0
  %76 = vmatpush1.msra.mxu0 0.0
  %77 = vmatprep.subr.mxu0 0.0
  %78 = vmatpush1.msra.mxu0 0.0
  %79 = vmatprep.subr.mxu0 0.0
  %80 = vmatpush1.msra.mxu0 0.0
  %81 = vmatprep.subr.mxu0 0.0
  %82 = vmatpush1.msra.mxu0 0.0
  %83 = vmatprep.subr.mxu0 0.0
  %84 = vmatpush1.msra.mxu0 0.0
  %85 = vmatprep.subr.mxu0 0.0
  %86 = vmatpush1.msra.mxu0 0.0
  %87 = vmatprep.subr.mxu0 0.0
  %88 = vmatpush1.msra.mxu0 0.0
  %89 = vmatprep.subr.mxu0 0.0
  %90 = vmatpush1.msra.mxu0 0.0
  %91 = vmatprep.subr.mxu0 0.0
  %92 = vmatpush1.msra.mxu0 0.0
  %93 = vmatprep.subr.mxu0 0.0
  %94 = vmatpush1.msra.mxu0 0.0
  %95 = vmatprep.subr.mxu0 0.0
  %96 = vmatpush1.msra.mxu0 %v32
  %97 = vmatprep.subr.mxu0 0.0
  %98 = vmatpush2.msra.mxu0 0.0
  %99 = vmatprep.subr.mxu0 0.0
  %100 = vmatpush2.msra.mxu0 0.0
  %101 = vmatprep.subr.mxu0 0.0
  %102 = vmatpush2.msra.mxu0 0.0
  %103 = vmatprep.subr.mxu0 0.0
  %104 = vmatpush2.msra.mxu0 0.0
  %105 = vmatprep.subr.mxu0 0.0
  %106 = vmatpush2.msra.mxu0 0.0
  %107 = vmatprep.subr.mxu0 0.0
  %108 = vmatpush2.msra.mxu0 0.0
  %109 = vmatprep.subr.mxu0 0.0
  %110 = vmatpush2.msra.mxu0 0.0
  %111 = vmatprep.subr.mxu0 0.0
  %112 = vmatpush2.msra.mxu0 0.0
  %113 = vmatprep.subr.mxu0 0.0
  %114 = vmatpush2.msra.mxu0 0.0
  %115 = vmatprep.subr.mxu0 0.0
  %116 = vmatpush2.msra.mxu0 0.0
  %117 = vmatprep.subr.mxu0 0.0
  %118 = vmatpush2.msra.mxu0 0.0
  %119 = vmatprep.subr.mxu0 0.0
  %120 = vmatpush2.msra.mxu0 0.0
  %121 = vmatprep.subr.mxu0 0.0
  %122 = vmatpush2.msra.mxu0 0.0
  %123 = vmatprep.subr.mxu0 0.0
  %124 = vmatpush2.msra.mxu0 0.0
  %125 = vmatprep.subr.mxu0 0.0
  %126 = vmatpush2.msra.mxu0 0.0
  %127 = vmatprep.subr.mxu0 0.0
  %128 = vmatpush2.msra.mxu0 0.0
  %129 = vmatprep.mubr.f32.mxu0 0.0
  %130 = vmatmul.mubr.f32.gmra.mxu0 %v42
  %v131 = vpop.f32.mrf.mxu0
  %v132 = vadd.f32 %v38, %v131
  %v133 = vpop.f32.mrf.mxu0
  %134 = vmatprep.mubr.f32.mxu0 0.0
  %135 = vmatmul.mubr.f32.gmra.mxu0 %v45
  %v136 = vpop.f32.mrf.mxu0
  %v137 = vadd.f32 %v38, %v136
  %v138 = vpop.f32.mrf.mxu0
  %139 = vmatprep.mubr.f32.mxu0 0.0
  %140 = vmatmul.mubr.f32.gmra.mxu0 %v48
  %v141 = vpop.f32.mrf.mxu0
  %v142 = vadd.f32 %v38, %v141
  %v143 = vpop.f32.mrf.mxu0
  %144 = vmatprep.mubr.f32.mxu0 0.0
  %145 = vmatmul.mubr.f32.gmra.mxu0 %v51
  %v146 = vpop.f32.mrf.mxu0
  %v147 = vadd.f32 %v38, %v146
  %v148 = vpop.f32.mrf.mxu0
  %149 = vmatprep.mubr.f32.mxu0 0.0
  %150 = vmatmul.mubr.f32.gmra.mxu0 %v54
  %v151 = vpop.f32.mrf.mxu0
  %v152 = vadd.f32 %v38, %v151
  %v153 = vpop.f32.mrf.mxu0
  %154 = vmatprep.mubr.f32.mxu0 0.0
  %155 = vmatmul.mubr.f32.gmra.mxu0 %v57
  %v156 = vpop.f32.mrf.mxu0
  %v157 = vadd.f32 %v38, %v156
  %v158 = vpop.f32.mrf.mxu0
  %159 = vmatprep.mubr.f32.mxu0 0.0
  %160 = vmatmul.mubr.f32.gmra.mxu0 %v60
  %v161 = vpop.f32.mrf.mxu0
  %v162 = vadd.f32 %v38, %v161
  %v163 = vpop.f32.mrf.mxu0
  %164 = vmatprep.mubr.f32.mxu0 0.0
  %165 = vmatmul.mubr.f32.gmra.mxu0 %v63
  %v166 = vpop.f32.mrf.mxu0
  %v167 = vadd.f32 %v38, %v166
  %v168 = vpop.f32.mrf.mxu0
  %169 = vdwg.mxu0
  %v170 = vld [vmem:[%s3] sm:$0xf]
  %v171 = vld [vmem:[%s3 + $0x4] sm:$0xf]
  %v172 = vld [vmem:[%s3 + $0x8] sm:$0xf]
  %v173 = vld [vmem:[%s3 + $0xc] sm:$0xf]
  %v178 = vunpack.c.l.b16 %v170
  %v179 = vunpack.c.l.b16 %v171
  %v180 = vunpack.c.l.b16 %v172
  %v181 = vunpack.c.l.b16 %v173
  %v182 = vpack.c.b16 %v179, %v178
  %v183 = vpack.c.b16 %v181, %v180
  %vm186 = vcmask 261120
  %v188 = vsel %vm186, 0, 0
  %190 = vmatprep.subr.bf16.mxu0 0
  %191 = vmatpush1.bf16.msra.mxu0 0
  %192 = vmatprep.subr.bf16.mxu0 0
  %193 = vmatpush1.bf16.msra.mxu0 0
  %194 = vmatprep.subr.bf16.mxu0 0
  %195 = vmatpush1.bf16.msra.mxu0 0
  %196 = vmatprep.subr.bf16.mxu0 0
  %197 = vmatpush1.bf16.msra.mxu0 0
  %198 = vmatprep.subr.bf16.mxu0 0
  %199 = vmatpush1.bf16.msra.mxu0 0
  %200 = vmatprep.subr.bf16.mxu0 0
  %201 = vmatpush1.bf16.msra.mxu0 0
  %202 = vmatprep.subr.bf16.mxu0 0
  %203 = vmatpush1.bf16.msra.mxu0 %v183
  %204 = vmatprep.subr.bf16.mxu0 0
  %205 = vmatpush1.bf16.msra.mxu0 %v182
  %206 = vmatprep.subr.bf16.mxu0 0
  %207 = vmatpush2.bf16.msra.mxu0 0
  %208 = vmatprep.subr.bf16.mxu0 0
  %209 = vmatpush2.bf16.msra.mxu0 0
  %210 = vmatprep.subr.bf16.mxu0 0
  %211 = vmatpush2.bf16.msra.mxu0 0
  %212 = vmatprep.subr.bf16.mxu0 0
  %213 = vmatpush2.bf16.msra.mxu0 0
  %214 = vmatprep.subr.bf16.mxu0 0
  %215 = vmatpush2.bf16.msra.mxu0 0
  %216 = vmatprep.subr.bf16.mxu0 0
  %217 = vmatpush2.bf16.msra.mxu0 0
  %218 = vmatprep.subr.bf16.mxu0 0
  %219 = vmatpush2.bf16.msra.mxu0 0
  %220 = vmatprep.subr.bf16.mxu0 0
  %221 = vmatpush2.bf16.msra.mxu0 0
  %222 = vmatprep.mubr.bf16.mxu0 0
  %223 = vmatmul.mubr.bf16.gmra.mxu0 %v188
  %v224 = vpop.f32.mrf.mxu0
  %v225 = vadd.f32 0.0, %v224
  %v226 = vpop.f32.mrf.mxu0
  %v227 = vpop.f32.mrf.mxu0
  %v228 = vpop.f32.mrf.mxu0
  %229 = vdwg.mxu0
  %v230 = vadd.f32 %v132, %v225
  %v231 = vxor.u32 %v230, 2147483648
  %v232 = vmul.f32 %v231, 1.442695
  %v233 = vpow.pop %v232
  %v234 = vadd.f32 %v233, 1.0
  %v235 = vrcp.pop %v234
  %v236 = vmul.f32 1.0, %v235
  %v237 = vtanh.pop %v230
  %v238 = vmul.f32 %v236, 0.0
  %240 = vrot.lane.b32.xlu0 %v237, 32
  %v241 = vpop.permute.xlu0 %240
  %v243 = vmul.f32 %v236, %v241
  %245 = vrot.lane.b32.xlu0 %v243, 32
  %v246 = vpop.permute.xlu0 %245
  %v248 = vadd.f32 %v238, %v246
  %v249 = vtanh.pop %v248
  %251 = vrot.lane.b32.xlu0 %v249, 32
  %v252 = vpop.permute.xlu0 %251
  %v254 = vmul.f32 %v236, %v252
  %v255 = vpack.c.bf16 %v254, %v254
  %257 = vrot.lane.b32.xlu0 %v255, 64
  %v258 = vpop.permute.xlu0 %257
  %v260 = vsel %vm186, %v258, 0
  %262 = vmatprep.subr.bf16.mxu0 0
  %263 = vmatpush1.bf16.msra.mxu0 0
  %264 = vmatprep.subr.bf16.mxu0 0
  %265 = vmatpush1.bf16.msra.mxu0 0
  %266 = vmatprep.subr.bf16.mxu0 0
  %267 = vmatpush1.bf16.msra.mxu0 0
  %268 = vmatprep.subr.bf16.mxu0 0
  %269 = vmatpush1.bf16.msra.mxu0 0
  %270 = vmatprep.subr.bf16.mxu0 0
  %271 = vmatpush1.bf16.msra.mxu0 0
  %272 = vmatprep.subr.bf16.mxu0 0
  %273 = vmatpush1.bf16.msra.mxu0 0
  %274 = vmatprep.subr.bf16.mxu0 0
  %275 = vmatpush1.bf16.msra.mxu0 %v183
  %276 = vmatprep.subr.bf16.mxu0 0
  %277 = vmatpush1.bf16.msra.mxu0 %v182
  %278 = vmatprep.subr.bf16.mxu0 0
  %279 = vmatpush2.bf16.msra.mxu0 0
  %280 = vmatprep.subr.bf16.mxu0 0
  %281 = vmatpush2.bf16.msra.mxu0 0
  %282 = vmatprep.subr.bf16.mxu0 0
  %283 = vmatpush2.bf16.msra.mxu0 0
  %284 = vmatprep.subr.bf16.mxu0 0
  %285 = vmatpush2.bf16.msra.mxu0 0
  %286 = vmatprep.subr.bf16.mxu0 0
  %287 = vmatpush2.bf16.msra.mxu0 0
  %288 = vmatprep.subr.bf16.mxu0 0
  %289 = vmatpush2.bf16.msra.mxu0 0
  %290 = vmatprep.subr.bf16.mxu0 0
  %291 = vmatpush2.bf16.msra.mxu0 0
  %292 = vmatprep.subr.bf16.mxu0 0
  %293 = vmatpush2.bf16.msra.mxu0 0
  %294 = vmatprep.mubr.bf16.mxu0 0
  %295 = vmatmul.mubr.bf16.gmra.mxu0 %v260
  %v296 = vpop.f32.mrf.mxu0
  %v297 = vadd.f32 0.0, %v296
  %v298 = vpop.f32.mrf.mxu0
  %v299 = vpop.f32.mrf.mxu0
  %v300 = vpop.f32.mrf.mxu0
  %301 = vdwg.mxu0
  %v302 = vadd.f32 %v137, %v297
  %v303 = vxor.u32 %v302, 2147483648
  %v304 = vmul.f32 %v303, 1.442695
  %v305 = vpow.pop %v304
  %v306 = vadd.f32 %v305, 1.0
  %v307 = vrcp.pop %v306
  %v308 = vmul.f32 1.0, %v307
  %v309 = vtanh.pop %v302
  %v310 = vmul.f32 %v308, %v248
  %312 = vrot.lane.b32.xlu0 %v309, 32
  %v313 = vpop.permute.xlu0 %312
  %v315 = vmul.f32 %v308, %v313
  %317 = vrot.lane.b32.xlu0 %v315, 32
  %v318 = vpop.permute.xlu0 %317
  %v320 = vadd.f32 %v310, %v318
  %v321 = vtanh.pop %v320
  %323 = vrot.lane.b32.xlu0 %v321, 32
  %v324 = vpop.permute.xlu0 %323
  %v326 = vmul.f32 %v308, %v324
  %v327 = vpack.c.bf16 %v326, %v326
  %329 = vrot.lane.b32.xlu0 %v327, 64
  %v330 = vpop.permute.xlu0 %329
  %v332 = vsel %vm186, %v330, 0
  %334 = vmatprep.subr.bf16.mxu0 0
  %335 = vmatpush1.bf16.msra.mxu0 0
  %336 = vmatprep.subr.bf16.mxu0 0
  %337 = vmatpush1.bf16.msra.mxu0 0
  %338 = vmatprep.subr.bf16.mxu0 0
  %339 = vmatpush1.bf16.msra.mxu0 0
  %340 = vmatprep.subr.bf16.mxu0 0
  %341 = vmatpush1.bf16.msra.mxu0 0
  %342 = vmatprep.subr.bf16.mxu0 0
  %343 = vmatpush1.bf16.msra.mxu0 0
  %344 = vmatprep.subr.bf16.mxu0 0
  %345 = vmatpush1.bf16.msra.mxu0 0
  %346 = vmatprep.subr.bf16.mxu0 0
  %347 = vmatpush1.bf16.msra.mxu0 %v183
  %348 = vmatprep.subr.bf16.mxu0 0
  %349 = vmatpush1.bf16.msra.mxu0 %v182
  %350 = vmatprep.subr.bf16.mxu0 0
  %351 = vmatpush2.bf16.msra.mxu0 0
  %352 = vmatprep.subr.bf16.mxu0 0
  %353 = vmatpush2.bf16.msra.mxu0 0
  %354 = vmatprep.subr.bf16.mxu0 0
  %355 = vmatpush2.bf16.msra.mxu0 0
  %356 = vmatprep.subr.bf16.mxu0 0
  %357 = vmatpush2.bf16.msra.mxu0 0
  %358 = vmatprep.subr.bf16.mxu0 0
  %359 = vmatpush2.bf16.msra.mxu0 0
  %360 = vmatprep.subr.bf16.mxu0 0
  %361 = vmatpush2.bf16.msra.mxu0 0
  %362 = vmatprep.subr.bf16.mxu0 0
  %363 = vmatpush2.bf16.msra.mxu0 0
  %364 = vmatprep.subr.bf16.mxu0 0
  %365 = vmatpush2.bf16.msra.mxu0 0
  %366 = vmatprep.mubr.bf16.mxu0 0
  %367 = vmatmul.mubr.bf16.gmra.mxu0 %v332
  %v368 = vpop.f32.mrf.mxu0
  %v369 = vadd.f32 0.0, %v368
  %v370 = vpop.f32.mrf.mxu0
  %v371 = vpop.f32.mrf.mxu0
  %v372 = vpop.f32.mrf.mxu0
  %373 = vdwg.mxu0
  %v374 = vadd.f32 %v142, %v369
  %v375 = vxor.u32 %v374, 2147483648
  %v376 = vmul.f32 %v375, 1.442695
  %v377 = vpow.pop %v376
  %v378 = vadd.f32 %v377, 1.0
  %v379 = vrcp.pop %v378
  %v380 = vmul.f32 1.0, %v379
  %v381 = vtanh.pop %v374
  %v382 = vmul.f32 %v380, %v320
  %384 = vrot.lane.b32.xlu0 %v381, 32
  %v385 = vpop.permute.xlu0 %384
  %v387 = vmul.f32 %v380, %v385
  %389 = vrot.lane.b32.xlu0 %v387, 32
  %v390 = vpop.permute.xlu0 %389
  %v392 = vadd.f32 %v382, %v390
  %v393 = vtanh.pop %v392
  %395 = vrot.lane.b32.xlu0 %v393, 32
  %v396 = vpop.permute.xlu0 %395
  %v398 = vmul.f32 %v380, %v396
  %v399 = vpack.c.bf16 %v398, %v398
  %401 = vrot.lane.b32.xlu0 %v399, 64
  %v402 = vpop.permute.xlu0 %401
  %v404 = vsel %vm186, %v402, 0
  %406 = vmatprep.subr.bf16.mxu0 0
  %407 = vmatpush1.bf16.msra.mxu0 0
  %408 = vmatprep.subr.bf16.mxu0 0
  %409 = vmatpush1.bf16.msra.mxu0 0
  %410 = vmatprep.subr.bf16.mxu0 0
  %411 = vmatpush1.bf16.msra.mxu0 0
  %412 = vmatprep.subr.bf16.mxu0 0
  %413 = vmatpush1.bf16.msra.mxu0 0
  %414 = vmatprep.subr.bf16.mxu0 0
  %415 = vmatpush1.bf16.msra.mxu0 0
  %416 = vmatprep.subr.bf16.mxu0 0
  %417 = vmatpush1.bf16.msra.mxu0 0
  %418 = vmatprep.subr.bf16.mxu0 0
  %419 = vmatpush1.bf16.msra.mxu0 %v183
  %420 = vmatprep.subr.bf16.mxu0 0
  %421 = vmatpush1.bf16.msra.mxu0 %v182
  %422 = vmatprep.subr.bf16.mxu0 0
  %423 = vmatpush2.bf16.msra.mxu0 0
  %424 = vmatprep.subr.bf16.mxu0 0
  %425 = vmatpush2.bf16.msra.mxu0 0
  %426 = vmatprep.subr.bf16.mxu0 0
  %427 = vmatpush2.bf16.msra.mxu0 0
  %428 = vmatprep.subr.bf16.mxu0 0
  %429 = vmatpush2.bf16.msra.mxu0 0
  %430 = vmatprep.subr.bf16.mxu0 0
  %431 = vmatpush2.bf16.msra.mxu0 0
  %432 = vmatprep.subr.bf16.mxu0 0
  %433 = vmatpush2.bf16.msra.mxu0 0
  %434 = vmatprep.subr.bf16.mxu0 0
  %435 = vmatpush2.bf16.msra.mxu0 0
  %436 = vmatprep.subr.bf16.mxu0 0
  %437 = vmatpush2.bf16.msra.mxu0 0
  %438 = vmatprep.mubr.bf16.mxu0 0
  %439 = vmatmul.mubr.bf16.gmra.mxu0 %v404
  %v440 = vpop.f32.mrf.mxu0
  %v441 = vadd.f32 0.0, %v440
  %v442 = vpop.f32.mrf.mxu0
  %v443 = vpop.f32.mrf.mxu0
  %v444 = vpop.f32.mrf.mxu0
  %445 = vdwg.mxu0
  %v446 = vadd.f32 %v147, %v441
  %v447 = vxor.u32 %v446, 2147483648
  %v448 = vmul.f32 %v447, 1.442695
  %v449 = vpow.pop %v448
  %v450 = vadd.f32 %v449, 1.0
  %v451 = vrcp.pop %v450
  %v452 = vmul.f32 1.0, %v451
  %v453 = vtanh.pop %v446
  %v454 = vmul.f32 %v452, %v392
  %456 = vrot.lane.b32.xlu0 %v453, 32
  %v457 = vpop.permute.xlu0 %456
  %v459 = vmul.f32 %v452, %v457
  %461 = vrot.lane.b32.xlu0 %v459, 32
  %v462 = vpop.permute.xlu0 %461
  %v464 = vadd.f32 %v454, %v462
  %v465 = vtanh.pop %v464
  %467 = vrot.lane.b32.xlu0 %v465, 32
  %v468 = vpop.permute.xlu0 %467
  %v470 = vmul.f32 %v452, %v468
  %v471 = vpack.c.bf16 %v470, %v470
  %473 = vrot.lane.b32.xlu0 %v471, 64
  %v474 = vpop.permute.xlu0 %473
  %v476 = vsel %vm186, %v474, 0
  %478 = vmatprep.subr.bf16.mxu0 0
  %479 = vmatpush1.bf16.msra.mxu0 0
  %480 = vmatprep.subr.bf16.mxu0 0
  %481 = vmatpush1.bf16.msra.mxu0 0
  %482 = vmatprep.subr.bf16.mxu0 0
  %483 = vmatpush1.bf16.msra.mxu0 0
  %484 = vmatprep.subr.bf16.mxu0 0
  %485 = vmatpush1.bf16.msra.mxu0 0
  %486 = vmatprep.subr.bf16.mxu0 0
  %487 = vmatpush1.bf16.msra.mxu0 0
  %488 = vmatprep.subr.bf16.mxu0 0
  %489 = vmatpush1.bf16.msra.mxu0 0
  %490 = vmatprep.subr.bf16.mxu0 0
  %491 = vmatpush1.bf16.msra.mxu0 %v183
  %492 = vmatprep.subr.bf16.mxu0 0
  %493 = vmatpush1.bf16.msra.mxu0 %v182
  %494 = vmatprep.subr.bf16.mxu0 0
  %495 = vmatpush2.bf16.msra.mxu0 0
  %496 = vmatprep.subr.bf16.mxu0 0
  %497 = vmatpush2.bf16.msra.mxu0 0
  %498 = vmatprep.subr.bf16.mxu0 0
  %499 = vmatpush2.bf16.msra.mxu0 0
  %500 = vmatprep.subr.bf16.mxu0 0
  %501 = vmatpush2.bf16.msra.mxu0 0
  %502 = vmatprep.subr.bf16.mxu0 0
  %503 = vmatpush2.bf16.msra.mxu0 0
  %504 = vmatprep.subr.bf16.mxu0 0
  %505 = vmatpush2.bf16.msra.mxu0 0
  %506 = vmatprep.subr.bf16.mxu0 0
  %507 = vmatpush2.bf16.msra.mxu0 0
  %508 = vmatprep.subr.bf16.mxu0 0
  %509 = vmatpush2.bf16.msra.mxu0 0
  %510 = vmatprep.mubr.bf16.mxu0 0
  %511 = vmatmul.mubr.bf16.gmra.mxu0 %v476
  %v512 = vpop.f32.mrf.mxu0
  %v513 = vadd.f32 0.0, %v512
  %v514 = vpop.f32.mrf.mxu0
  %v515 = vpop.f32.mrf.mxu0
  %v516 = vpop.f32.mrf.mxu0
  %517 = vdwg.mxu0
  %v518 = vadd.f32 %v152, %v513
  %v519 = vxor.u32 %v518, 2147483648
  %v520 = vmul.f32 %v519, 1.442695
  %v521 = vpow.pop %v520
  %v522 = vadd.f32 %v521, 1.0
  %v523 = vrcp.pop %v522
  %v524 = vmul.f32 1.0, %v523
  %v525 = vtanh.pop %v518
  %v526 = vmul.f32 %v524, %v464
  %528 = vrot.lane.b32.xlu0 %v525, 32
  %v529 = vpop.permute.xlu0 %528
  %v531 = vmul.f32 %v524, %v529
  %533 = vrot.lane.b32.xlu0 %v531, 32
  %v534 = vpop.permute.xlu0 %533
  %v536 = vadd.f32 %v526, %v534
  %v537 = vtanh.pop %v536
  %539 = vrot.lane.b32.xlu0 %v537, 32
  %v540 = vpop.permute.xlu0 %539
  %v542 = vmul.f32 %v524, %v540
  %v543 = vpack.c.bf16 %v542, %v542
  %545 = vrot.lane.b32.xlu0 %v543, 64
  %v546 = vpop.permute.xlu0 %545
  %v548 = vsel %vm186, %v546, 0
  %550 = vmatprep.subr.bf16.mxu0 0
  %551 = vmatpush1.bf16.msra.mxu0 0
  %552 = vmatprep.subr.bf16.mxu0 0
  %553 = vmatpush1.bf16.msra.mxu0 0
  %554 = vmatprep.subr.bf16.mxu0 0
  %555 = vmatpush1.bf16.msra.mxu0 0
  %556 = vmatprep.subr.bf16.mxu0 0
  %557 = vmatpush1.bf16.msra.mxu0 0
  %558 = vmatprep.subr.bf16.mxu0 0
  %559 = vmatpush1.bf16.msra.mxu0 0
  %560 = vmatprep.subr.bf16.mxu0 0
  %561 = vmatpush1.bf16.msra.mxu0 0
  %562 = vmatprep.subr.bf16.mxu0 0
  %563 = vmatpush1.bf16.msra.mxu0 %v183
  %564 = vmatprep.subr.bf16.mxu0 0
  %565 = vmatpush1.bf16.msra.mxu0 %v182
  %566 = vmatprep.subr.bf16.mxu0 0
  %567 = vmatpush2.bf16.msra.mxu0 0
  %568 = vmatprep.subr.bf16.mxu0 0
  %569 = vmatpush2.bf16.msra.mxu0 0
  %570 = vmatprep.subr.bf16.mxu0 0
  %571 = vmatpush2.bf16.msra.mxu0 0
  %572 = vmatprep.subr.bf16.mxu0 0
  %573 = vmatpush2.bf16.msra.mxu0 0
  %574 = vmatprep.subr.bf16.mxu0 0
  %575 = vmatpush2.bf16.msra.mxu0 0
  %576 = vmatprep.subr.bf16.mxu0 0
  %577 = vmatpush2.bf16.msra.mxu0 0
  %578 = vmatprep.subr.bf16.mxu0 0
  %579 = vmatpush2.bf16.msra.mxu0 0
  %580 = vmatprep.subr.bf16.mxu0 0
  %581 = vmatpush2.bf16.msra.mxu0 0
  %582 = vmatprep.mubr.bf16.mxu0 0
  %583 = vmatmul.mubr.bf16.gmra.mxu0 %v548
  %v584 = vpop.f32.mrf.mxu0
  %v585 = vadd.f32 0.0, %v584
  %v586 = vpop.f32.mrf.mxu0
  %v587 = vpop.f32.mrf.mxu0
  %v588 = vpop.f32.mrf.mxu0
  %589 = vdwg.mxu0
  %v590 = vadd.f32 %v157, %v585
  %v591 = vxor.u32 %v590, 2147483648
  %v592 = vmul.f32 %v591, 1.442695
  %v593 = vpow.pop %v592
  %v594 = vadd.f32 %v593, 1.0
  %v595 = vrcp.pop %v594
  %v596 = vmul.f32 1.0, %v595
  %v597 = vtanh.pop %v590
  %v598 = vmul.f32 %v596, %v536
  %600 = vrot.lane.b32.xlu0 %v597, 32
  %v601 = vpop.permute.xlu0 %600
  %v603 = vmul.f32 %v596, %v601
  %605 = vrot.lane.b32.xlu0 %v603, 32
  %v606 = vpop.permute.xlu0 %605
  %v608 = vadd.f32 %v598, %v606
  %v609 = vtanh.pop %v608
  %611 = vrot.lane.b32.xlu0 %v609, 32
  %v612 = vpop.permute.xlu0 %611
  %v614 = vmul.f32 %v596, %v612
  %v615 = vpack.c.bf16 %v614, %v614
  %617 = vrot.lane.b32.xlu0 %v615, 64
  %v618 = vpop.permute.xlu0 %617
  %v620 = vsel %vm186, %v618, 0
  %622 = vmatprep.subr.bf16.mxu0 0
  %623 = vmatpush1.bf16.msra.mxu0 0
  %624 = vmatprep.subr.bf16.mxu0 0
  %625 = vmatpush1.bf16.msra.mxu0 0
  %626 = vmatprep.subr.bf16.mxu0 0
  %627 = vmatpush1.bf16.msra.mxu0 0
  %628 = vmatprep.subr.bf16.mxu0 0
  %629 = vmatpush1.bf16.msra.mxu0 0
  %630 = vmatprep.subr.bf16.mxu0 0
  %631 = vmatpush1.bf16.msra.mxu0 0
  %632 = vmatprep.subr.bf16.mxu0 0
  %633 = vmatpush1.bf16.msra.mxu0 0
  %634 = vmatprep.subr.bf16.mxu0 0
  %635 = vmatpush1.bf16.msra.mxu0 %v183
  %636 = vmatprep.subr.bf16.mxu0 0
  %637 = vmatpush1.bf16.msra.mxu0 %v182
  %638 = vmatprep.subr.bf16.mxu0 0
  %639 = vmatpush2.bf16.msra.mxu0 0
  %640 = vmatprep.subr.bf16.mxu0 0
  %641 = vmatpush2.bf16.msra.mxu0 0
  %642 = vmatprep.subr.bf16.mxu0 0
  %643 = vmatpush2.bf16.msra.mxu0 0
  %644 = vmatprep.subr.bf16.mxu0 0
  %645 = vmatpush2.bf16.msra.mxu0 0
  %646 = vmatprep.subr.bf16.mxu0 0
  %647 = vmatpush2.bf16.msra.mxu0 0
  %648 = vmatprep.subr.bf16.mxu0 0
  %649 = vmatpush2.bf16.msra.mxu0 0
  %650 = vmatprep.subr.bf16.mxu0 0
  %651 = vmatpush2.bf16.msra.mxu0 0
  %652 = vmatprep.subr.bf16.mxu0 0
  %653 = vmatpush2.bf16.msra.mxu0 0
  %654 = vmatprep.mubr.bf16.mxu0 0
  %655 = vmatmul.mubr.bf16.gmra.mxu0 %v620
  %v656 = vpop.f32.mrf.mxu0
  %v657 = vadd.f32 0.0, %v656
  %v658 = vpop.f32.mrf.mxu0
  %v659 = vpop.f32.mrf.mxu0
  %v660 = vpop.f32.mrf.mxu0
  %661 = vdwg.mxu0
  %v662 = vadd.f32 %v162, %v657
  %v663 = vxor.u32 %v662, 2147483648
  %v664 = vmul.f32 %v663, 1.442695
  %v665 = vpow.pop %v664
  %v666 = vadd.f32 %v665, 1.0
  %v667 = vrcp.pop %v666
  %v668 = vmul.f32 1.0, %v667
  %v669 = vtanh.pop %v662
  %v670 = vmul.f32 %v668, %v608
  %672 = vrot.lane.b32.xlu0 %v669, 32
  %v673 = vpop.permute.xlu0 %672
  %v675 = vmul.f32 %v668, %v673
  %677 = vrot.lane.b32.xlu0 %v675, 32
  %v678 = vpop.permute.xlu0 %677
  %v680 = vadd.f32 %v670, %v678
  %v681 = vtanh.pop %v680
  %683 = vrot.lane.b32.xlu0 %v681, 32
  %v684 = vpop.permute.xlu0 %683
  %v686 = vmul.f32 %v668, %v684
  %v687 = vpack.c.bf16 %v686, %v686
  %689 = vrot.lane.b32.xlu0 %v687, 64
  %v690 = vpop.permute.xlu0 %689
  %v692 = vsel %vm186, %v690, 0
  %694 = vmatprep.subr.bf16.mxu0 0
  %695 = vmatpush1.bf16.msra.mxu0 0
  %696 = vmatprep.subr.bf16.mxu0 0
  %697 = vmatpush1.bf16.msra.mxu0 0
  %698 = vmatprep.subr.bf16.mxu0 0
  %699 = vmatpush1.bf16.msra.mxu0 0
  %700 = vmatprep.subr.bf16.mxu0 0
  %701 = vmatpush1.bf16.msra.mxu0 0
  %702 = vmatprep.subr.bf16.mxu0 0
  %703 = vmatpush1.bf16.msra.mxu0 0
  %704 = vmatprep.subr.bf16.mxu0 0
  %705 = vmatpush1.bf16.msra.mxu0 0
  %706 = vmatprep.subr.bf16.mxu0 0
  %707 = vmatpush1.bf16.msra.mxu0 %v183
  %708 = vmatprep.subr.bf16.mxu0 0
  %709 = vmatpush1.bf16.msra.mxu0 %v182
  %710 = vmatprep.subr.bf16.mxu0 0
  %711 = vmatpush2.bf16.msra.mxu0 0
  %712 = vmatprep.subr.bf16.mxu0 0
  %713 = vmatpush2.bf16.msra.mxu0 0
  %714 = vmatprep.subr.bf16.mxu0 0
  %715 = vmatpush2.bf16.msra.mxu0 0
  %716 = vmatprep.subr.bf16.mxu0 0
  %717 = vmatpush2.bf16.msra.mxu0 0
  %718 = vmatprep.subr.bf16.mxu0 0
  %719 = vmatpush2.bf16.msra.mxu0 0
  %720 = vmatprep.subr.bf16.mxu0 0
  %721 = vmatpush2.bf16.msra.mxu0 0
  %722 = vmatprep.subr.bf16.mxu0 0
  %723 = vmatpush2.bf16.msra.mxu0 0
  %724 = vmatprep.subr.bf16.mxu0 0
  %725 = vmatpush2.bf16.msra.mxu0 0
  %726 = vmatprep.mubr.bf16.mxu0 0
  %727 = vmatmul.mubr.bf16.gmra.mxu0 %v692
  %v728 = vpop.f32.mrf.mxu0
  %v729 = vadd.f32 0.0, %v728
  %v730 = vpop.f32.mrf.mxu0
  %v731 = vpop.f32.mrf.mxu0
  %v732 = vpop.f32.mrf.mxu0
  %733 = vdwg.mxu0
  %v734 = vadd.f32 %v167, %v729
  %v735 = vxor.u32 %v734, 2147483648
  %v736 = vmul.f32 %v735, 1.442695
  %v737 = vpow.pop %v736
  %v738 = vadd.f32 %v737, 1.0
  %v739 = vrcp.pop %v738
  %v740 = vmul.f32 1.0, %v739
  %v741 = vtanh.pop %v734
  %v742 = vmul.f32 %v740, %v680
  %744 = vrot.lane.b32.xlu0 %v741, 32
  %v745 = vpop.permute.xlu0 %744
  %v747 = vmul.f32 %v740, %v745
  %749 = vrot.lane.b32.xlu0 %v747, 32
  %v750 = vpop.permute.xlu0 %749
  %v752 = vadd.f32 %v742, %v750
  %v753 = vtanh.pop %v752
  %755 = vrot.lane.b32.xlu0 %v753, 32
  %v756 = vpop.permute.xlu0 %755
  %v758 = vmul.f32 %v740, %v756
  %760 = vrot.lane.b32.xlu0 %v254, 64
  %v761 = vpop.permute.xlu0 %760
  %764 = vrot.lane.b32.xlu0 %v326, 96
  %v765 = vpop.permute.xlu0 %764
  %768 = vrot.lane.b32.xlu0 %v470, 32
  %v769 = vpop.permute.xlu0 %768
  %772 = vrot.lane.b32.xlu0 %v542, 64
  %v773 = vpop.permute.xlu0 %772
  %776 = vrot.lane.b32.xlu0 %v614, 96
  %v777 = vpop.permute.xlu0 %776
  %780 = vrot.lane.b32.xlu0 %v758, 32
  %v781 = vpop.permute.xlu0 %780
  %v783 = vsel %vm186, %v761, %v765
  %vm784 = vcmask 523264
  %v785 = vsel %vm784, %v783, %v398
  %vm786 = vcmask 785408
  %v787 = vsel %vm786, %v785, %v769
  %v788 = vsel %vm186, %v773, %v777
  %v789 = vsel %vm784, %v788, %v686
  %v790 = vsel %vm786, %v789, %v781
  %v791 = vld [vmem:[%s4] sm:$0xff]
  %v792 = vld [vmem:[%s4 + $0x8] sm:$0xff]
  %v793 = vld [vmem:[%s4 + $0x10] sm:$0xff]
  %v794 = vld [vmem:[%s4 + $0x18] sm:$0xff]
  %v795 = vld [vmem:[%s4 + $0x20] sm:$0xff]
  %v796 = vld [vmem:[%s4 + $0x28] sm:$0xff]
  %v797 = vld [vmem:[%s4 + $0x30] sm:$0xff]
  %v798 = vld [vmem:[%s4 + $0x38] sm:$0xff]
  %v799 = vld [vmem:[%s4 + $0x40] sm:$0xff]
  %v800 = vld [vmem:[%s4 + $0x48] sm:$0xff]
  %v801 = vld [vmem:[%s4 + $0x50] sm:$0xff]
  %v802 = vld [vmem:[%s4 + $0x58] sm:$0xff]
  %v803 = vld [vmem:[%s4 + $0x60] sm:$0xff]
  %v804 = vld [vmem:[%s4 + $0x68] sm:$0xff]
  %v805 = vld [vmem:[%s4 + $0x70] sm:$0xff]
  %v806 = vld [vmem:[%s4 + $0x78] sm:$0xff]
  %v807 = vld [vmem:[%s4 + $0x80] sm:$0xff]
  %v808 = vld [vmem:[%s4 + $0x88] sm:$0xff]
  %v809 = vld [vmem:[%s4 + $0x90] sm:$0xff]
  %v810 = vld [vmem:[%s4 + $0x98] sm:$0xff]
  %v811 = vld [vmem:[%s4 + $0xa0] sm:$0xff]
  %v812 = vld [vmem:[%s4 + $0xa8] sm:$0xff]
  %v813 = vld [vmem:[%s4 + $0xb0] sm:$0xff]
  %v814 = vld [vmem:[%s4 + $0xb8] sm:$0xff]
  %v815 = vld [vmem:[%s4 + $0xc0] sm:$0xff]
  %v816 = vld [vmem:[%s4 + $0xc8] sm:$0xff]
  %v817 = vld [vmem:[%s4 + $0xd0] sm:$0xff]
  %v818 = vld [vmem:[%s4 + $0xd8] sm:$0xff]
  %v819 = vld [vmem:[%s4 + $0xe0] sm:$0xff]
  %v820 = vld [vmem:[%s4 + $0xe8] sm:$0xff]
  %v821 = vld [vmem:[%s4 + $0xf0] sm:$0xff]
  %v822 = vld [vmem:[%s4 + $0xf8] sm:$0xff]
  %v823 = vld [vmem:[%s5] sm:$0x1]
  %v825 = vlaneseq
  %v826 = vshrl.u32 %v825, 7
  %v827 = vsub.s32 0, %v826
  %v828 = vrot.slane %v823, %v827
  %830 = vmatprep.subr.mxu0 0.0
  %831 = vmatpush1.msra.mxu0 %v806
  %832 = vmatprep.subr.mxu0 0.0
  %833 = vmatpush1.msra.mxu0 %v805
  %834 = vmatprep.subr.mxu0 0.0
  %835 = vmatpush1.msra.mxu0 %v804
  %836 = vmatprep.subr.mxu0 0.0
  %837 = vmatpush1.msra.mxu0 %v803
  %838 = vmatprep.subr.mxu0 0.0
  %839 = vmatpush1.msra.mxu0 %v802
  %840 = vmatprep.subr.mxu0 0.0
  %841 = vmatpush1.msra.mxu0 %v801
  %842 = vmatprep.subr.mxu0 0.0
  %843 = vmatpush1.msra.mxu0 %v800
  %844 = vmatprep.subr.mxu0 0.0
  %845 = vmatpush1.msra.mxu0 %v799
  %846 = vmatprep.subr.mxu0 0.0
  %847 = vmatpush1.msra.mxu0 %v798
  %848 = vmatprep.subr.mxu0 0.0
  %849 = vmatpush1.msra.mxu0 %v797
  %850 = vmatprep.subr.mxu0 0.0
  %851 = vmatpush1.msra.mxu0 %v796
  %852 = vmatprep.subr.mxu0 0.0
  %853 = vmatpush1.msra.mxu0 %v795
  %854 = vmatprep.subr.mxu0 0.0
  %855 = vmatpush1.msra.mxu0 %v794
  %856 = vmatprep.subr.mxu0 0.0
  %857 = vmatpush1.msra.mxu0 %v793
  %858 = vmatprep.subr.mxu0 0.0
  %859 = vmatpush1.msra.mxu0 %v792
  %860 = vmatprep.subr.mxu0 0.0
  %861 = vmatpush1.msra.mxu0 %v791
  %862 = vmatprep.subr.mxu0 0.0
  %863 = vmatpush2.msra.mxu0 %v822
  %864 = vmatprep.subr.mxu0 0.0
  %865 = vmatpush2.msra.mxu0 %v821
  %866 = vmatprep.subr.mxu0 0.0
  %867 = vmatpush2.msra.mxu0 %v820
  %868 = vmatprep.subr.mxu0 0.0
  %869 = vmatpush2.msra.mxu0 %v819
  %870 = vmatprep.subr.mxu0 0.0
  %871 = vmatpush2.msra.mxu0 %v818
  %872 = vmatprep.subr.mxu0 0.0
  %873 = vmatpush2.msra.mxu0 %v817
  %874 = vmatprep.subr.mxu0 0.0
  %875 = vmatpush2.msra.mxu0 %v816
  %876 = vmatprep.subr.mxu0 0.0
  %877 = vmatpush2.msra.mxu0 %v815
  %878 = vmatprep.subr.mxu0 0.0
  %879 = vmatpush2.msra.mxu0 %v814
  %880 = vmatprep.subr.mxu0 0.0
  %881 = vmatpush2.msra.mxu0 %v813
  %882 = vmatprep.subr.mxu0 0.0
  %883 = vmatpush2.msra.mxu0 %v812
  %884 = vmatprep.subr.mxu0 0.0
  %885 = vmatpush2.msra.mxu0 %v811
  %886 = vmatprep.subr.mxu0 0.0
  %887 = vmatpush2.msra.mxu0 %v810
  %888 = vmatprep.subr.mxu0 0.0
  %889 = vmatpush2.msra.mxu0 %v809
  %890 = vmatprep.subr.mxu0 0.0
  %891 = vmatpush2.msra.mxu0 %v808
  %892 = vmatprep.subr.mxu0 0.0
  %893 = vmatpush2.msra.mxu0 %v807
  %894 = vmatprep.mubr.f32.mxu0 %v790
  %895 = vmatmul.mubr.f32.gmra.mxu0 %v787
  %v896 = vpop.f32.mrf.mxu0
  %v897 = vadd.f32 %v828, %v896
  %v898 = vpop.f32.mrf.mxu0
  %899 = vdwg.mxu0
  %900 = vst.msk [vmem:[%s6] sm:$0xff] %vm40, %v897
  // Predicated region
  $region26: #{lstm_stock_forward.1} parent=0 // pred_check
    _
  $region27: #{lstm_stock_forward.1} parent=0 // pred_check_branch
    %902 = sbr.rel (0) target = $region29
  $region28: #{lstm_stock_forward.1} parent=0 // pred_region
    _
  $region29: #{lstm_stock_forward.1} parent=0 // pred_fallthru
    _
  // Predicated region
  $region30: #{lstm_stock_forward.1} parent=0 // pred_check
    _
  $region31: #{lstm_stock_forward.1} parent=0 // pred_check_branch
    %904 = sbr.rel (0) target = $region33
  $region32: #{lstm_stock_forward.1} parent=0 // pred_region
    _
  $region33: #{lstm_stock_forward.1} parent=0 // pred_fallthru
    _

</llo_original>
